<compile_context>
chip_gen: v7x
topology: tpu7x:2x2x1
jax: 0.10.0
libtpu: 0.0.40
codegen_flags: <defaults>
</compile_context>

<pallas_src>
import jax
import jax.numpy as jnp
from jax.experimental import pallas as pl
from jax.experimental.pallas import tpu as pltpu


def _toon_kernel(params_ref, x_ref, o_ref):
    bi = pl.program_id(0)
    scale      = params_ref[bi, 0]
    offset     = params_ref[bi, 1]
    saturation = params_ref[bi, 2]
    inv_gamma  = params_ref[bi, 3]
    hueshift   = params_ref[bi, 4]

    def _load(c):
        v = x_ref[0, c].astype(jnp.float32)            # (TR, LW) channel plane
        # ((x + brightness) * expose - 0.5) * contrast + 0.5, folded on host.
        return jnp.clip(v * scale + offset, 0.0, 1.0)

    r = _load(0)
    g = _load(1)
    b = _load(2)

    # ---- rgb_to_hsv (hue in [0, 1)) ----
    maxc = jnp.maximum(jnp.maximum(r, g), b)
    minc = jnp.minimum(jnp.minimum(r, g), b)
    v = maxc
    delta = maxc - minc
    s = delta * pl.reciprocal(jnp.maximum(maxc, 1e-8), approx=True)

    gray = delta == 0.0
    inv_d = 1.0 / jnp.where(gray, 1.0, delta)          # exact: hue-sector safety
    rc = (maxc - r) * inv_d
    gc = (maxc - g) * inv_d
    bc = (maxc - b) * inv_d
    h = jnp.where(maxc == r, bc - gc,
                  jnp.where(maxc == g, 2.0 + rc - bc, 4.0 + gc - rc))
    # h/6 lies in (-1, 1): (h/6) % 1.0  ==  h/6 + (h/6 < 0)
    h = h * (1.0 / 6.0)
    h = h + jnp.where(h < 0.0, 1.0, 0.0)
    h = jnp.where(gray, 0.0, h)

    # ---- saturation & hue adjustments ----
    s = jnp.clip(s * saturation, 0.0, 1.0)
    hh = h + hueshift
    h = hh - jnp.trunc(hh)                             # torch.frac semantics

    # ---- hsv_to_rgb ----
    h6 = h * 6.0
    i_f = jnp.floor(h6)
    f = h6 - i_f
    p = v * (1.0 - s)
    q = v * (1.0 - f * s)
    t = v * (1.0 - (1.0 - f) * s)
    idx = i_f + jnp.where(i_f < 0.0, 6.0, 0.0)         # mod(i_f, 6), i_f in [-6, 5]

    m0 = idx == 0.0
    m1 = idx == 1.0
    m2 = idx == 2.0
    m3 = idx == 3.0
    m4 = idx == 4.0

    # ---- safe_pow(rgb, 1/gamma), clamp, store -- one channel at a time ----
    # TODO(synk): exact IndexHelper.safe_pow semantics unverified; 0 -> 0, x>0 -> x**p
    def _finish(chan, c):
        pw = jnp.exp(inv_gamma * jnp.log(jnp.maximum(c, 1e-8)))
        o_ref[0, chan] = jnp.clip(jnp.where(c > 0.0, pw, 0.0),
                                  0.0, 1.0).astype(o_ref.dtype)

    _finish(0, jnp.where(m0, v, jnp.where(m1, q,
               jnp.where(m2 | m3, p, jnp.where(m4, t, v)))))
    _finish(1, jnp.where(m0, t, jnp.where(m1 | m2, v,
               jnp.where(m3, q, p))))
    _finish(2, jnp.where(m0 | m1, p, jnp.where(m2, t,
               jnp.where(m3 | m4, v, q))))


def _vmem_capacity_bytes():
    try:
        return int(pltpu.get_tpu_info().vmem_capacity_bytes)
    except Exception:
        return 64 << 20                                # conservative (v7x per-TC)


def _pick_tile_rows(R, lane_w, itemsize, B, vmem_cap):
    """Rows per block: sublane-packed, generation-aware I/O budget, and
    enough grid steps (B * n_r >= ~8) to feed v7x's two TensorCores."""
    sub = {4: 8, 2: 16, 1: 32}.get(itemsize, 8)
    if R <= sub:
        return R                                       # full extent is always legal
    io_budget = (2 << 20) if vmem_cap >= (96 << 20) else (1 << 20)
    tr = (io_budget // (3 * lane_w * itemsize)) // sub * sub
    tr = max(sub, tr)
    want_nr = -(-8 // max(B, 1))                       # ceil(8 / B) grid steps per batch
    cap = max(sub, (-(-R // want_nr)) // sub * sub)
    tr = min(tr, cap)
    return R if tr >= R else tr


def color_adjustment_toon(x, brightness, contrast, saturation, gamma,
                          expose, hueshift):
    """x: (B, 3, H, W); brightness/contrast/saturation/gamma: per-batch (B,);
    expose/hueshift: scalars (or broadcastable to (B,))."""
    B, C, H, W = x.shape
    assert C == 3, "RGB input expected"
    itemsize = jnp.dtype(x.dtype).itemsize

    # Lane-dense view: (B, 3, H*W//128, 128) whenever possible (free reshape).
    LANES = 128
    if (H * W) % LANES == 0:
        R, LW = (H * W) // LANES, LANES
    else:
        R, LW = H, W
    xv = x.reshape(B, C, R, LW)

    vmem_cap = _vmem_capacity_bytes()
    TR = _pick_tile_rows(R, LW, itemsize, B, vmem_cap)
    n_r = pl.cdiv(R, TR)

    # Explicit VMEM limit: 2x(in) + 2x(out) double buffers + ~24 live f32 planes.
    block_elems = TR * LW
    est = 4 * 3 * block_elems * itemsize + 24 * block_elems * 4 + (2 << 20)
    vmem_limit = int(min(vmem_cap * 3 // 4, max(est, 32 << 20)))

    # Fold the scalar pipeline on host:
    #   ((x + brightness) * expose - 0.5) * contrast + 0.5  ==  x * scale + offset
    f32 = jnp.float32
    brightness = jnp.broadcast_to(jnp.asarray(brightness, f32).reshape(-1), (B,))
    contrast   = jnp.broadcast_to(jnp.asarray(contrast, f32).reshape(-1), (B,))
    saturation = jnp.broadcast_to(jnp.asarray(saturation, f32).reshape(-1), (B,))
    gamma      = jnp.broadcast_to(
        jnp.maximum(jnp.asarray(gamma, f32).reshape(-1), 0.3), (B,))
    expose     = jnp.broadcast_to(jnp.asarray(expose, f32).reshape(-1), (B,))
    hueshift   = jnp.broadcast_to(jnp.asarray(hueshift, f32).reshape(-1), (B,))

    scale = expose * contrast
    offset = (brightness * expose - 0.5) * contrast + 0.5
    params = jnp.stack([scale, offset, saturation, 1.0 / gamma, hueshift],
                       axis=1)                          # (B, 5) -> SMEM

    img_spec = pl.BlockSpec((1, C, TR, LW), lambda bb, rr: (bb, 0, rr, 0))

    out = pl.pallas_call(
        _toon_kernel,
        out_shape=jax.ShapeDtypeStruct((B, C, R, LW), x.dtype),
        grid=(B, n_r),
        in_specs=[pl.BlockSpec(memory_space=pltpu.MemorySpace.SMEM), img_spec],
        out_specs=img_spec,
        compiler_params=pltpu.CompilerParams(
            dimension_semantics=("parallel", "parallel"),
            vmem_limit_bytes=vmem_limit),
    )(params, xv)

    return out.reshape(B, C, H, W)


def _reference(x, brightness, contrast, saturation, gamma, expose, hueshift):
    """Pure-JAX mirror of the PyTorch module (same math as the kernel)."""
    B = x.shape[0]
    v4 = lambda a: jnp.asarray(a, jnp.float32).reshape(B, 1, 1, 1)
    v3 = lambda a: jnp.asarray(a, jnp.float32).reshape(B, 1, 1)
    gamma = jnp.maximum(v4(gamma), 0.3)
    x = jnp.asarray(x, jnp.float32)
    x = (x + v4(brightness)) * expose
    x = (x - 0.5) * v4(contrast) + 0.5
    x = jnp.clip(x, 0.0, 1.0)
    r, g, b = x[:, 0], x[:, 1], x[:, 2]
    maxc = jnp.maximum(jnp.maximum(r, g), b)
    minc = jnp.minimum(jnp.minimum(r, g), b)
    v = maxc
    delta = maxc - minc
    s = delta / jnp.maximum(maxc, 1e-8)
    safe_d = jnp.where(delta == 0.0, 1.0, delta)
    rc, gc, bc = (maxc - r) / safe_d, (maxc - g) / safe_d, (maxc - b) / safe_d
    h = jnp.where(maxc == r, bc - gc,
                  jnp.where(maxc == g, 2.0 + rc - bc, 4.0 + gc - rc))
    h = (h / 6.0) % 1.0
    h = jnp.where(delta == 0.0, 0.0, h)
    s = jnp.clip(s * v3(saturation), 0.0, 1.0)
    hh = h + hueshift
    h = hh - jnp.trunc(hh)
    h6 = h * 6.0
    i_f = jnp.floor(h6)
    f = h6 - i_f
    p = v * (1.0 - s)
    q = v * (1.0 - f * s)
    t = v * (1.0 - (1.0 - f) * s)
    idx = i_f + jnp.where(i_f < 0.0, 6.0, 0.0)
    m0, m1, m2, m3, m4 = (idx == 0.0), (idx == 1.0), (idx == 2.0), \
                         (idx == 3.0), (idx == 4.0)
    r2 = jnp.where(m0, v, jnp.where(m1, q, jnp.where(m2 | m3, p,
                   jnp.where(m4, t, v))))
    g2 = jnp.where(m0, t, jnp.where(m1 | m2, v, jnp.where(m3, q, p)))
    b2 = jnp.where(m0 | m1, p, jnp.where(m2, t, jnp.where(m3 | m4, v, q)))
    rgb = jnp.stack([r2, g2, b2], axis=1)
    pw = jnp.exp((1.0 / gamma) * jnp.log(jnp.maximum(rgb, 1e-8)))
    return jnp.clip(jnp.where(rgb > 0.0, pw, 0.0), 0.0, 1.0)


if __name__ == "__main__":
    key = jax.random.PRNGKey(0)
    k = jax.random.split(key, 6)

    B, C, H, W = 2, 3, 16, 16
    x = jax.random.uniform(k[0], (B, C, H, W), dtype=jnp.float32)
    brightness = 0.1 * jax.random.normal(k[1], (B,), dtype=jnp.float32)
    contrast = 1.0 + 0.2 * jax.random.normal(k[2], (B,), dtype=jnp.float32)
    saturation = 1.0 + 0.3 * jax.random.normal(k[3], (B,), dtype=jnp.float32)
    gamma = 1.0 + 0.5 * jax.random.uniform(k[4], (B,), dtype=jnp.float32)
    expose = 1.1          # scalar (used without i.view in the reference)
    hueshift = 0.15       # scalar (used without i.view in the reference)

    y = color_adjustment_toon(x, brightness, contrast, saturation, gamma,
                              expose, hueshift)
    jax.block_until_ready(y)

    y_ref = _reference(x, brightness, contrast, saturation, gamma,
                       expose, hueshift)
    assert y.shape == (B, C, H, W)
    assert bool(jnp.all(jnp.isfinite(y)))
    assert bool(jnp.all((y >= 0.0) & (y <= 1.0)))
    assert bool(jnp.max(jnp.abs(y.astype(jnp.float32) - y_ref)) < 1e-2)
    print("KERNEL_OK")
</pallas_src>

<mosaic_0001>
module attributes {stable_mosaic.version = 11 : i64} {
  func.func @_toon_kernel(%arg0: i32, %arg1: i32, %arg2: memref<2x5xf32, #tpu.memory_space<smem>>, %arg3: memref<1x3x2x128xf32, #tpu.memory_space<vmem>>, %arg4: memref<1x3x2x128xf32, #tpu.memory_space<vmem>>) attributes {dimension_semantics = [#tpu.dimension_semantics<parallel>, #tpu.dimension_semantics<parallel>], iteration_bounds = array<i64: 2, 1>, scalar_prefetch = 0 : i64, scratch_operands = 0 : i64, tpu.core_type = #tpu.core_type<tc>, window_params = [{transform_indices = @transform_0, window_bounds = array<i64: 2, 5>}, {transform_indices = @transform_1, window_bounds = array<i64: 1, 3, 2, 128>}, {transform_indices = @transform_2, window_bounds = array<i64: 1, 3, 2, 128>}]} {
    %0 = arith.index_cast %arg0 : i32 to index
    %c0 = arith.constant 0 : index
    %1 = memref.load %arg2[%0, %c0] : memref<2x5xf32, #tpu.memory_space<smem>>
    %2 = arith.index_cast %arg0 : i32 to index
    %c1 = arith.constant 1 : index
    %3 = memref.load %arg2[%2, %c1] : memref<2x5xf32, #tpu.memory_space<smem>>
    %4 = arith.index_cast %arg0 : i32 to index
    %c2 = arith.constant 2 : index
    %5 = memref.load %arg2[%4, %c2] : memref<2x5xf32, #tpu.memory_space<smem>>
    %6 = arith.index_cast %arg0 : i32 to index
    %c3 = arith.constant 3 : index
    %7 = memref.load %arg2[%6, %c3] : memref<2x5xf32, #tpu.memory_space<smem>>
    %8 = arith.index_cast %arg0 : i32 to index
    %c4 = arith.constant 4 : index
    %9 = memref.load %arg2[%8, %c4] : memref<2x5xf32, #tpu.memory_space<smem>>
    %c0_0 = arith.constant 0 : index
    %c0_1 = arith.constant 0 : index
    %c0_2 = arith.constant 0 : index
    %c0_3 = arith.constant 0 : index
    %10 = vector.load %arg3[%c0_0, %c0_1, %c0_2, %c0_3] : memref<1x3x2x128xf32, #tpu.memory_space<vmem>>, vector<1x1x2x128xf32>
    %11 = vector.shape_cast %10 : vector<1x1x2x128xf32> to vector<2x128xf32>
    %12 = vector.broadcast %1 : f32 to vector<2x128xf32>
    %13 = arith.mulf %11, %12 : vector<2x128xf32>
    %14 = vector.broadcast %3 : f32 to vector<2x128xf32>
    %15 = arith.addf %13, %14 : vector<2x128xf32>
    %cst = arith.constant 0.000000e+00 : f32
    %cst_4 = arith.constant 1.000000e+00 : f32
    %16 = vector.broadcast %cst : f32 to vector<2x128xf32>
    %17 = arith.maximumf %16, %15 : vector<2x128xf32>
    %18 = vector.broadcast %cst_4 : f32 to vector<2x128xf32>
    %19 = arith.minimumf %18, %17 : vector<2x128xf32>
    %c0_5 = arith.constant 0 : index
    %c1_6 = arith.constant 1 : index
    %c0_7 = arith.constant 0 : index
    %c0_8 = arith.constant 0 : index
    %20 = vector.load %arg3[%c0_5, %c1_6, %c0_7, %c0_8] : memref<1x3x2x128xf32, #tpu.memory_space<vmem>>, vector<1x1x2x128xf32>
    %21 = vector.shape_cast %20 : vector<1x1x2x128xf32> to vector<2x128xf32>
    %22 = vector.broadcast %1 : f32 to vector<2x128xf32>
    %23 = arith.mulf %21, %22 : vector<2x128xf32>
    %24 = vector.broadcast %3 : f32 to vector<2x128xf32>
    %25 = arith.addf %23, %24 : vector<2x128xf32>
    %cst_9 = arith.constant 0.000000e+00 : f32
    %cst_10 = arith.constant 1.000000e+00 : f32
    %26 = vector.broadcast %cst_9 : f32 to vector<2x128xf32>
    %27 = arith.maximumf %26, %25 : vector<2x128xf32>
    %28 = vector.broadcast %cst_10 : f32 to vector<2x128xf32>
    %29 = arith.minimumf %28, %27 : vector<2x128xf32>
    %c0_11 = arith.constant 0 : index
    %c2_12 = arith.constant 2 : index
    %c0_13 = arith.constant 0 : index
    %c0_14 = arith.constant 0 : index
    %30 = vector.load %arg3[%c0_11, %c2_12, %c0_13, %c0_14] : memref<1x3x2x128xf32, #tpu.memory_space<vmem>>, vector<1x1x2x128xf32>
    %31 = vector.shape_cast %30 : vector<1x1x2x128xf32> to vector<2x128xf32>
    %32 = vector.broadcast %1 : f32 to vector<2x128xf32>
    %33 = arith.mulf %31, %32 : vector<2x128xf32>
    %34 = vector.broadcast %3 : f32 to vector<2x128xf32>
    %35 = arith.addf %33, %34 : vector<2x128xf32>
    %cst_15 = arith.constant 0.000000e+00 : f32
    %cst_16 = arith.constant 1.000000e+00 : f32
    %36 = vector.broadcast %cst_15 : f32 to vector<2x128xf32>
    %37 = arith.maximumf %36, %35 : vector<2x128xf32>
    %38 = vector.broadcast %cst_16 : f32 to vector<2x128xf32>
    %39 = arith.minimumf %38, %37 : vector<2x128xf32>
    %40 = arith.maximumf %19, %29 : vector<2x128xf32>
    %41 = arith.maximumf %40, %39 : vector<2x128xf32>
    %42 = arith.minimumf %19, %29 : vector<2x128xf32>
    %43 = arith.minimumf %42, %39 : vector<2x128xf32>
    %44 = arith.subf %41, %43 : vector<2x128xf32>
    %cst_17 = arith.constant 9.99999993E-9 : f32
    %45 = vector.broadcast %cst_17 : f32 to vector<2x128xf32>
    %46 = arith.maximumf %41, %45 : vector<2x128xf32>
    %47 = tpu.reciprocal %46 {approx = true} : vector<2x128xf32> -> vector<2x128xf32>
    %48 = arith.mulf %44, %47 : vector<2x128xf32>
    %cst_18 = arith.constant 0.000000e+00 : f32
    %49 = vector.broadcast %cst_18 : f32 to vector<2x128xf32>
    %50 = arith.cmpf oeq, %44, %49 : vector<2x128xf32>
    %cst_19 = arith.constant 1.000000e+00 : f32
    %51 = vector.broadcast %cst_19 : f32 to vector<2x128xf32>
    %52 = arith.select %50, %51, %44 : vector<2x128xi1>, vector<2x128xf32>
    %cst_20 = arith.constant 1.000000e+00 : f32
    %53 = vector.broadcast %cst_20 : f32 to vector<2x128xf32>
    %54 = arith.divf %53, %52 : vector<2x128xf32>
    %55 = arith.subf %41, %19 : vector<2x128xf32>
    %56 = arith.mulf %55, %54 : vector<2x128xf32>
    %57 = arith.subf %41, %29 : vector<2x128xf32>
    %58 = arith.mulf %57, %54 : vector<2x128xf32>
    %59 = arith.subf %41, %39 : vector<2x128xf32>
    %60 = arith.mulf %59, %54 : vector<2x128xf32>
    %61 = arith.cmpf oeq, %41, %19 : vector<2x128xf32>
    %62 = arith.subf %60, %58 : vector<2x128xf32>
    %63 = arith.cmpf oeq, %41, %29 : vector<2x128xf32>
    %cst_21 = arith.constant 2.000000e+00 : f32
    %64 = vector.broadcast %cst_21 : f32 to vector<2x128xf32>
    %65 = arith.addf %64, %56 : vector<2x128xf32>
    %66 = arith.subf %65, %60 : vector<2x128xf32>
    %cst_22 = arith.constant 4.000000e+00 : f32
    %67 = vector.broadcast %cst_22 : f32 to vector<2x128xf32>
    %68 = arith.addf %67, %58 : vector<2x128xf32>
    %69 = arith.subf %68, %56 : vector<2x128xf32>
    %70 = arith.select %63, %66, %69 : vector<2x128xi1>, vector<2x128xf32>
    %71 = arith.select %61, %62, %70 : vector<2x128xi1>, vector<2x128xf32>
    %cst_23 = arith.constant 0.166666672 : f32
    %72 = vector.broadcast %cst_23 : f32 to vector<2x128xf32>
    %73 = arith.mulf %71, %72 : vector<2x128xf32>
    %cst_24 = arith.constant 0.000000e+00 : f32
    %74 = vector.broadcast %cst_24 : f32 to vector<2x128xf32>
    %75 = arith.cmpf olt, %73, %74 : vector<2x128xf32>
    %cst_25 = arith.constant 1.000000e+00 : f32
    %cst_26 = arith.constant 0.000000e+00 : f32
    %76 = vector.broadcast %cst_25 : f32 to vector<2x128xf32>
    %77 = vector.broadcast %cst_26 : f32 to vector<2x128xf32>
    %78 = arith.select %75, %76, %77 : vector<2x128xi1>, vector<2x128xf32>
    %79 = arith.addf %73, %78 : vector<2x128xf32>
    %cst_27 = arith.constant 0.000000e+00 : f32
    %80 = vector.broadcast %cst_27 : f32 to vector<2x128xf32>
    %81 = arith.select %50, %80, %79 : vector<2x128xi1>, vector<2x128xf32>
    %82 = vector.broadcast %5 : f32 to vector<2x128xf32>
    %83 = arith.mulf %48, %82 : vector<2x128xf32>
    %cst_28 = arith.constant 0.000000e+00 : f32
    %cst_29 = arith.constant 1.000000e+00 : f32
    %84 = vector.broadcast %cst_28 : f32 to vector<2x128xf32>
    %85 = arith.maximumf %84, %83 : vector<2x128xf32>
    %86 = vector.broadcast %cst_29 : f32 to vector<2x128xf32>
    %87 = arith.minimumf %86, %85 : vector<2x128xf32>
    %88 = vector.broadcast %9 : f32 to vector<2x128xf32>
    %89 = arith.addf %81, %88 : vector<2x128xf32>
    %cst_30 = arith.constant 0.000000e+00 : f32
    %90 = vector.broadcast %cst_30 : f32 to vector<2x128xf32>
    %91 = arith.cmpf olt, %89, %90 : vector<2x128xf32>
    %92 = math.ceil %89 : vector<2x128xf32>
    %93 = math.floor %89 : vector<2x128xf32>
    %94 = arith.select %91, %92, %93 : vector<2x128xi1>, vector<2x128xf32>
    %95 = arith.subf %89, %94 : vector<2x128xf32>
    %cst_31 = arith.constant 6.000000e+00 : f32
    %96 = vector.broadcast %cst_31 : f32 to vector<2x128xf32>
    %97 = arith.mulf %95, %96 : vector<2x128xf32>
    %98 = math.floor %97 : vector<2x128xf32>
    %99 = arith.subf %97, %98 : vector<2x128xf32>
    %cst_32 = arith.constant 1.000000e+00 : f32
    %100 = vector.broadcast %cst_32 : f32 to vector<2x128xf32>
    %101 = arith.subf %100, %87 : vector<2x128xf32>
    %102 = arith.mulf %41, %101 : vector<2x128xf32>
    %103 = arith.mulf %99, %87 : vector<2x128xf32>
    %cst_33 = arith.constant 1.000000e+00 : f32
    %104 = vector.broadcast %cst_33 : f32 to vector<2x128xf32>
    %105 = arith.subf %104, %103 : vector<2x128xf32>
    %106 = arith.mulf %41, %105 : vector<2x128xf32>
    %cst_34 = arith.constant 1.000000e+00 : f32
    %107 = vector.broadcast %cst_34 : f32 to vector<2x128xf32>
    %108 = arith.subf %107, %99 : vector<2x128xf32>
    %109 = arith.mulf %108, %87 : vector<2x128xf32>
    %cst_35 = arith.constant 1.000000e+00 : f32
    %110 = vector.broadcast %cst_35 : f32 to vector<2x128xf32>
    %111 = arith.subf %110, %109 : vector<2x128xf32>
    %112 = arith.mulf %41, %111 : vector<2x128xf32>
    %cst_36 = arith.constant 0.000000e+00 : f32
    %113 = vector.broadcast %cst_36 : f32 to vector<2x128xf32>
    %114 = arith.cmpf olt, %98, %113 : vector<2x128xf32>
    %cst_37 = arith.constant 6.000000e+00 : f32
    %cst_38 = arith.constant 0.000000e+00 : f32
    %115 = vector.broadcast %cst_37 : f32 to vector<2x128xf32>
    %116 = vector.broadcast %cst_38 : f32 to vector<2x128xf32>
    %117 = arith.select %114, %115, %116 : vector<2x128xi1>, vector<2x128xf32>
    %118 = arith.addf %98, %117 : vector<2x128xf32>
    %cst_39 = arith.constant 0.000000e+00 : f32
    %119 = vector.broadcast %cst_39 : f32 to vector<2x128xf32>
    %120 = arith.cmpf oeq, %118, %119 : vector<2x128xf32>
    %cst_40 = arith.constant 1.000000e+00 : f32
    %121 = vector.broadcast %cst_40 : f32 to vector<2x128xf32>
    %122 = arith.cmpf oeq, %118, %121 : vector<2x128xf32>
    %cst_41 = arith.constant 2.000000e+00 : f32
    %123 = vector.broadcast %cst_41 : f32 to vector<2x128xf32>
    %124 = arith.cmpf oeq, %118, %123 : vector<2x128xf32>
    %cst_42 = arith.constant 3.000000e+00 : f32
    %125 = vector.broadcast %cst_42 : f32 to vector<2x128xf32>
    %126 = arith.cmpf oeq, %118, %125 : vector<2x128xf32>
    %cst_43 = arith.constant 4.000000e+00 : f32
    %127 = vector.broadcast %cst_43 : f32 to vector<2x128xf32>
    %128 = arith.cmpf oeq, %118, %127 : vector<2x128xf32>
    %129 = arith.ori %124, %126 : vector<2x128xi1>
    %130 = arith.select %128, %112, %41 : vector<2x128xi1>, vector<2x128xf32>
    %131 = arith.select %129, %102, %130 : vector<2x128xi1>, vector<2x128xf32>
    %132 = arith.select %122, %106, %131 : vector<2x128xi1>, vector<2x128xf32>
    %133 = arith.select %120, %41, %132 : vector<2x128xi1>, vector<2x128xf32>
    %cst_44 = arith.constant 9.99999993E-9 : f32
    %134 = vector.broadcast %cst_44 : f32 to vector<2x128xf32>
    %135 = arith.maximumf %133, %134 : vector<2x128xf32>
    %136 = math.log %135 : vector<2x128xf32>
    %137 = vector.broadcast %7 : f32 to vector<2x128xf32>
    %138 = arith.mulf %137, %136 : vector<2x128xf32>
    %139 = math.exp %138 : vector<2x128xf32>
    %cst_45 = arith.constant 0.000000e+00 : f32
    %140 = vector.broadcast %cst_45 : f32 to vector<2x128xf32>
    %141 = arith.cmpf ogt, %133, %140 : vector<2x128xf32>
    %cst_46 = arith.constant 0.000000e+00 : f32
    %142 = vector.broadcast %cst_46 : f32 to vector<2x128xf32>
    %143 = arith.select %141, %139, %142 : vector<2x128xi1>, vector<2x128xf32>
    %cst_47 = arith.constant 0.000000e+00 : f32
    %cst_48 = arith.constant 1.000000e+00 : f32
    %144 = vector.broadcast %cst_47 : f32 to vector<2x128xf32>
    %145 = arith.maximumf %144, %143 : vector<2x128xf32>
    %146 = vector.broadcast %cst_48 : f32 to vector<2x128xf32>
    %147 = arith.minimumf %146, %145 : vector<2x128xf32>
    %c0_49 = arith.constant 0 : index
    %c0_50 = arith.constant 0 : index
    %c0_51 = arith.constant 0 : index
    %c0_52 = arith.constant 0 : index
    %148 = vector.load %arg4[%c0_49, %c0_50, %c0_51, %c0_52] : memref<1x3x2x128xf32, #tpu.memory_space<vmem>>, vector<1x1x2x128xf32>
    %149 = vector.shape_cast %148 : vector<1x1x2x128xf32> to vector<2x128xf32>
    %150 = vector.shape_cast %147 : vector<2x128xf32> to vector<1x1x2x128xf32>
    tpu.vector_store %arg4[%c0_49, %c0_50, %c0_51, %c0_52], %150 {strides = array<i32>} : memref<1x3x2x128xf32, #tpu.memory_space<vmem>>, vector<1x1x2x128xf32>,
    %151 = arith.ori %122, %124 : vector<2x128xi1>
    %152 = arith.select %126, %106, %102 : vector<2x128xi1>, vector<2x128xf32>
    %153 = arith.select %151, %41, %152 : vector<2x128xi1>, vector<2x128xf32>
    %154 = arith.select %120, %112, %153 : vector<2x128xi1>, vector<2x128xf32>
    %cst_53 = arith.constant 9.99999993E-9 : f32
    %155 = vector.broadcast %cst_53 : f32 to vector<2x128xf32>
    %156 = arith.maximumf %154, %155 : vector<2x128xf32>
    %157 = math.log %156 : vector<2x128xf32>
    %158 = vector.broadcast %7 : f32 to vector<2x128xf32>
    %159 = arith.mulf %158, %157 : vector<2x128xf32>
    %160 = math.exp %159 : vector<2x128xf32>
    %cst_54 = arith.constant 0.000000e+00 : f32
    %161 = vector.broadcast %cst_54 : f32 to vector<2x128xf32>
    %162 = arith.cmpf ogt, %154, %161 : vector<2x128xf32>
    %cst_55 = arith.constant 0.000000e+00 : f32
    %163 = vector.broadcast %cst_55 : f32 to vector<2x128xf32>
    %164 = arith.select %162, %160, %163 : vector<2x128xi1>, vector<2x128xf32>
    %cst_56 = arith.constant 0.000000e+00 : f32
    %cst_57 = arith.constant 1.000000e+00 : f32
    %165 = vector.broadcast %cst_56 : f32 to vector<2x128xf32>
    %166 = arith.maximumf %165, %164 : vector<2x128xf32>
    %167 = vector.broadcast %cst_57 : f32 to vector<2x128xf32>
    %168 = arith.minimumf %167, %166 : vector<2x128xf32>
    %c0_58 = arith.constant 0 : index
    %c1_59 = arith.constant 1 : index
    %c0_60 = arith.constant 0 : index
    %c0_61 = arith.constant 0 : index
    %169 = vector.load %arg4[%c0_58, %c1_59, %c0_60, %c0_61] : memref<1x3x2x128xf32, #tpu.memory_space<vmem>>, vector<1x1x2x128xf32>
    %170 = vector.shape_cast %169 : vector<1x1x2x128xf32> to vector<2x128xf32>
    %171 = vector.shape_cast %168 : vector<2x128xf32> to vector<1x1x2x128xf32>
    tpu.vector_store %arg4[%c0_58, %c1_59, %c0_60, %c0_61], %171 {strides = array<i32>} : memref<1x3x2x128xf32, #tpu.memory_space<vmem>>, vector<1x1x2x128xf32>,
    %172 = arith.ori %120, %122 : vector<2x128xi1>
    %173 = arith.ori %126, %128 : vector<2x128xi1>
    %174 = arith.select %173, %41, %106 : vector<2x128xi1>, vector<2x128xf32>
    %175 = arith.select %124, %112, %174 : vector<2x128xi1>, vector<2x128xf32>
    %176 = arith.select %172, %102, %175 : vector<2x128xi1>, vector<2x128xf32>
    %cst_62 = arith.constant 9.99999993E-9 : f32
    %177 = vector.broadcast %cst_62 : f32 to vector<2x128xf32>
    %178 = arith.maximumf %176, %177 : vector<2x128xf32>
    %179 = math.log %178 : vector<2x128xf32>
    %180 = vector.broadcast %7 : f32 to vector<2x128xf32>
    %181 = arith.mulf %180, %179 : vector<2x128xf32>
    %182 = math.exp %181 : vector<2x128xf32>
    %cst_63 = arith.constant 0.000000e+00 : f32
    %183 = vector.broadcast %cst_63 : f32 to vector<2x128xf32>
    %184 = arith.cmpf ogt, %176, %183 : vector<2x128xf32>
    %cst_64 = arith.constant 0.000000e+00 : f32
    %185 = vector.broadcast %cst_64 : f32 to vector<2x128xf32>
    %186 = arith.select %184, %182, %185 : vector<2x128xi1>, vector<2x128xf32>
    %cst_65 = arith.constant 0.000000e+00 : f32
    %cst_66 = arith.constant 1.000000e+00 : f32
    %187 = vector.broadcast %cst_65 : f32 to vector<2x128xf32>
    %188 = arith.maximumf %187, %186 : vector<2x128xf32>
    %189 = vector.broadcast %cst_66 : f32 to vector<2x128xf32>
    %190 = arith.minimumf %189, %188 : vector<2x128xf32>
    %c0_67 = arith.constant 0 : index
    %c2_68 = arith.constant 2 : index
    %c0_69 = arith.constant 0 : index
    %c0_70 = arith.constant 0 : index
    %191 = vector.load %arg4[%c0_67, %c2_68, %c0_69, %c0_70] : memref<1x3x2x128xf32, #tpu.memory_space<vmem>>, vector<1x1x2x128xf32>
    %192 = vector.shape_cast %191 : vector<1x1x2x128xf32> to vector<2x128xf32>
    %193 = vector.shape_cast %190 : vector<2x128xf32> to vector<1x1x2x128xf32>
    tpu.vector_store %arg4[%c0_67, %c2_68, %c0_69, %c0_70], %193 {strides = array<i32>} : memref<1x3x2x128xf32, #tpu.memory_space<vmem>>, vector<1x1x2x128xf32>,
    return
  }
  func.func @transform_0(%arg0: i32, %arg1: i32) -> (i32, i32) {
    %c0_i32 = arith.constant 0 : i32
    %c0_i32_0 = arith.constant 0 : i32
    %c0_i32_1 = arith.constant 0 : i32
    return %c0_i32, %c0_i32_0 : i32, i32
  }
  func.func @transform_1(%arg0: i32, %arg1: i32) -> (i32, i32, i32, i32) {
    %c0_i32 = arith.constant 0 : i32
    %c0_i32_0 = arith.constant 0 : i32
    %c0_i32_1 = arith.constant 0 : i32
    return %arg0, %c0_i32, %arg1, %c0_i32_0 : i32, i32, i32, i32
  }
  func.func @transform_2(%arg0: i32, %arg1: i32) -> (i32, i32, i32, i32) {
    %c0_i32 = arith.constant 0 : i32
    %c0_i32_0 = arith.constant 0 : i32
    %c0_i32_1 = arith.constant 0 : i32
    return %arg0, %c0_i32, %arg1, %c0_i32_0 : i32, i32, i32, i32
  }
}

</mosaic_0001>

<llo_original>
// kernel: tpu_custom_call.1
$region0: #{tpu_custom_call.1}
  #allocation0 [shape = 'u32[]', space=smem, size = 0x4, offset = 0x4, fixed_abs, tag = 'smem constant byte address 0x4 - core index']
  #allocation1 [shape = 'u32[144,128]{1,0:T(1,128)}', space=vmem, size = 0x12000, scoped, tag = 'internal scratch']
  %s0 = inlined_call_operand.hbm [shape: f32[2,5], index: 0, kind: input, shape index: {}]
  %s1 = inlined_call_operand.hbm [shape: f32[2,3,2,128], index: 1, kind: input, shape index: {}]
  %s2 = inlined_call_operand.hbm [shape: f32[2,3,2,128], index: 2, kind: output, shape index: {}]
  %s3 = sld [smem:[#allocation0]]
  $region49: #{tpu_custom_call.1} parent=0
    _
  %s5 = ssub.s32 1, %s3
  %s6 = scalar_select 0, %s5, %s3
  $region1: #{tpu_custom_call.1} parent=0
    #allocation2 [shape = 'u8[1024]{0}', space=smem, size = 0x400, scoped, tag = 'input window, operand 0, single buffered']
    #allocation3 [shape = 's32[2]{0}', space=sflag, size = 0x8, scoped, tag = 'scoped memory for tpu_custom_call.1']
    #allocation4 [shape = 's32[2]{0}', space=sflag, size = 0x8, scoped, tag = 'scoped memory for tpu_custom_call.1']
    #allocation5 [shape = 's32[2]{0}', space=sflag, size = 0x8, scoped, tag = 'scoped memory for tpu_custom_call.1']
    #allocation6 [shape = 'u8[6144]{0}', space=vmem, size = 0x1800, scoped, tag = 'input window, operand 1']
    #allocation7 [shape = 'u8[6144]{0}', space=vmem, size = 0x1800, scoped, tag = 'output window, operand 0']
    %7 = vsyncpa [#allocation5], 0
    %8 = vsyncpa [#allocation3], 0
    %s9 = scalar_lea.sflag [#allocation3], 1
    %10 = vsyncpa %s9, 0
    %11 = vsyncpa [#allocation4], 0
    %s12 = scalar_lea.sflag [#allocation4], 1
    %13 = vsyncpa %s12, 0
    loop: start=0, step=1, limit=4
    $region2: #{tpu_custom_call.1} parent=1 // loop_pre_header
      _
    $region3: #{tpu_custom_call.1} parent=1 // loop_header
      %s15 = sphi 0, %s19
      %p16 = scmp.ge.s32.totalorder %s15, 4
      %s22 = sphi 0, %s34
      %s23 = sphi 0, %s30
      %s24 = sphi 0, %s22
      %s25 = sphi 0, %s23
      %s26 = sphi 0, %s24
      %s27 = sphi 0, %s25
      %s35 = sphi 0, %s35
      %s37 = sphi 0, %s35
      %s38 = sphi 0, %s37
      %s52 = sphi 0, %s38
      %s60 = sphi 0, %s62
      %s63 = sphi 0, %s60
      %s64 = sphi 0, %s63
      %s80 = sphi 0, %s64
      %s88 = sphi 0, %s90
      %s91 = sphi 0, %s88
      %s92 = sphi 0, %s91
      %s108 = sphi 0, %s92
    $region4: #{tpu_custom_call.1} parent=1 // loop_header_branch
      %18 = sbr.rel (%p16) target = $region8
    $region5: #{tpu_custom_call.1} parent=1 // loop_body
      %s20 = ssub.s32 %s15, 1
      %s21 = ssub.s32 %s15, 2
      %s28 = sadd.s32 1, %s23
      %p29 = scmp.ge.s32.totalorder %s28, 1
      %s30 = scalar_select %p29, 0, %s28
      %s31 = sadd.s32 1, %s22
      %s32 = scalar_select %p29, %s31, %s22
      %p33 = scmp.ge.s32.totalorder %s32, 2
      %s34 = scalar_select %p33, 0, %s32
      %s36 = sadd.s32 %s35, 1
      %p39 = scmp.eq.s32.totalorder %s15, 1
      %p40 = scmp.ne.s32.totalorder %s35, %s37
      %p41 = scmp.eq.s32.totalorder %s15, 0
      %p42 = por %p40, %p41
      %p43 = scmp.ne.s32.totalorder %s35, %s37
      %p44 = scmp.eq.s32.totalorder %s20, 1
      %p45 = por %p43, %p44
      %p46 = scmp.ne.s32.totalorder %s37, %s38
      %p47 = scmp.eq.s32.totalorder %s20, 0
      %p48 = por %p46, %p47
      %p49 = scmp.ne.s32.totalorder %s37, %s38
      %p50 = scmp.eq.s32.totalorder %s21, 1
      %p51 = por %p49, %p50
      %p53 = scmp.ne.s32.totalorder %s38, %s52
      %p54 = scmp.eq.s32.totalorder %s21, 0
      %p55 = por %p53, %p54
      %s56 = ssub.s32 %s22, %s34
      %s57 = ssub.s32 %s23, %s30
      %s58 = sor.u32 %s56, %s57
      %p59 = scmp.eq.s32.totalorder %s58, 0
      %s61 = sadd.s32 %s60, 1
      %s62 = scalar_select %p59, %s60, %s61
      %p65 = pneg %p59
      %p66 = scmp.eq.s32.totalorder %s15, 1
      %p67 = por %p65, %p66
      %p68 = scmp.ne.s32.totalorder %s60, %s63
      %p69 = scmp.eq.s32.totalorder %s15, 0
      %p70 = por %p68, %p69
      %p71 = scmp.ne.s32.totalorder %s60, %s63
      %p72 = scmp.eq.s32.totalorder %s20, 1
      %p73 = por %p71, %p72
      %p74 = scmp.ne.s32.totalorder %s63, %s64
      %p75 = scmp.eq.s32.totalorder %s20, 0
      %p76 = por %p74, %p75
      %p77 = scmp.ne.s32.totalorder %s63, %s64
      %p78 = scmp.eq.s32.totalorder %s21, 1
      %p79 = por %p77, %p78
      %p81 = scmp.ne.s32.totalorder %s64, %s80
      %p82 = scmp.eq.s32.totalorder %s21, 0
      %p83 = por %p81, %p82
      %s84 = ssub.s32 %s22, %s34
      %s85 = ssub.s32 %s23, %s30
      %s86 = sor.u32 %s84, %s85
      %p87 = scmp.eq.s32.totalorder %s86, 0
      %s89 = sadd.s32 %s88, 1
      %s90 = scalar_select %p87, %s88, %s89
      %p93 = pneg %p87
      %p94 = scmp.eq.s32.totalorder %s15, 1
      %p95 = por %p93, %p94
      %p96 = scmp.ne.s32.totalorder %s88, %s91
      %p97 = scmp.eq.s32.totalorder %s15, 0
      %p98 = por %p96, %p97
      %p99 = scmp.ne.s32.totalorder %s88, %s91
      %p100 = scmp.eq.s32.totalorder %s20, 1
      %p101 = por %p99, %p100
      %p102 = scmp.ne.s32.totalorder %s91, %s92
      %p103 = scmp.eq.s32.totalorder %s20, 0
      %p104 = por %p102, %p103
      %p105 = scmp.ne.s32.totalorder %s91, %s92
      %p106 = scmp.eq.s32.totalorder %s21, 1
      %p107 = por %p105, %p106
      %p109 = scmp.ne.s32.totalorder %s92, %s108
      %p110 = scmp.eq.s32.totalorder %s21, 0
      %p111 = por %p109, %p110
      %p112 = scmp.le.s32.totalorder 1, %s15
      %p113 = scmp.lt.s32.totalorder %s15, 3
      %p114 = pnand %p112, %p113
      %p115 = pneg %p114
      // Predicated region
      $region9: #{tpu_custom_call.1} parent=5 // pred_check
        _
      $region10: #{tpu_custom_call.1} parent=5 // pred_check_branch
        %117 = sbr.rel (%p114) target = $region12
      $region11: #{tpu_custom_call.1} parent=5 // pred_region
        %s118 = ssub.s32 %s15, 1
        // Predicated region
        $region13: #{tpu_custom_call.1} parent=11 // pred_check
          %p119 = pneg %p48
        $region14: #{tpu_custom_call.1} parent=11 // pred_check_branch
          %121 = sbr.rel (%p119) target = $region16
        $region15: #{tpu_custom_call.1} parent=11 // pred_region
          %s123 = ssub.s32 32, 32
          %124 = vsyncadd [#allocation5], %s123
          %127 = dma.hbm_to_smem %s0, 32, [#allocation2], [#allocation5]
        $region16: #{tpu_custom_call.1} parent=11 // pred_fallthru
          _
      $region12: #{tpu_custom_call.1} parent=5 // pred_fallthru
        _
      %p128 = scmp.lt.s32.totalorder %s15, 2
      // Predicated region
      $region17: #{tpu_custom_call.1} parent=5 // pred_check
        %p129 = pneg %p128
      $region18: #{tpu_custom_call.1} parent=5 // pred_check_branch
        %131 = sbr.rel (%p129) target = $region20
      $region19: #{tpu_custom_call.1} parent=5 // pred_region
        // Predicated region
        $region21: #{tpu_custom_call.1} parent=19 // pred_check
          %p132 = pneg %p70
        $region22: #{tpu_custom_call.1} parent=19 // pred_check_branch
          %134 = sbr.rel (%p132) target = $region24
        $region23: #{tpu_custom_call.1} parent=19 // pred_region
          %s135 = sand.u32 %s60, 1
          %s136 = scalar_lea.sflag [#allocation3], %s135
          %s137 = sand.u32 %s60, 1
          %s138 = smul.addr %s137, 6
          %s139 = scalar_lea.vmem [#allocation6], %s138
          %s141 = ssub.s32 96, 96
          %142 = vsyncadd %s136, %s141
          %s143 = smul.addr %s22, 3
          %s144 = sadd.s32 %s23, %s143
          %s145 = smul.addr %s144, 32
          %s146 = scalar_lea.hbm %s1, %s145
          %s147 = sshll.u32 %s139, 4
          %s148 = int_to_ptr.vmem [resolvable:$true] %s147
          %153 = dma.hbm_to_vmem [thread:$0]  %s146, 96, %s148, %s136, 32, 32, 2
        $region24: #{tpu_custom_call.1} parent=19 // pred_fallthru
          _
      $region20: #{tpu_custom_call.1} parent=5 // pred_fallthru
        _
      %p154 = scmp.le.s32.totalorder 1, %s15
      %p155 = scmp.lt.s32.totalorder %s15, 3
      %p156 = pnand %p154, %p155
      %p157 = pneg %p156
      // Predicated region
      $region25: #{tpu_custom_call.1} parent=5 // pred_check
        _
      $region26: #{tpu_custom_call.1} parent=5 // pred_check_branch
        %159 = sbr.rel (%p156) target = $region28
      $region27: #{tpu_custom_call.1} parent=5 // pred_region
        %s160 = ssub.s32 %s15, 1
        // Predicated region
        $region29: #{tpu_custom_call.1} parent=27 // pred_check
          %p161 = pneg %p48
        $region30: #{tpu_custom_call.1} parent=27 // pred_check_branch
          %163 = sbr.rel (%p161) target = $region32
        $region31: #{tpu_custom_call.1} parent=27 // pred_region
          %164 = dma.done [#allocation5], 32
        $region32: #{tpu_custom_call.1} parent=27 // pred_fallthru
          _
        %s165 = sand.u32 %s63, 1
        %s166 = scalar_lea.sflag [#allocation3], %s165
        %s167 = sand.u32 %s63, 1
        %s168 = smul.addr %s167, 6
        %s169 = scalar_lea.vmem [#allocation6], %s168
        // Predicated region
        $region33: #{tpu_custom_call.1} parent=27 // pred_check
          %p170 = pneg %p76
        $region34: #{tpu_custom_call.1} parent=27 // pred_check_branch
          %172 = sbr.rel (%p170) target = $region36
        $region35: #{tpu_custom_call.1} parent=27 // pred_region
          %173 = dma.done %s166, 96
        $region36: #{tpu_custom_call.1} parent=27 // pred_fallthru
          _
        %174 = sfence
        %p175 = pneg %p48
        %p176 = pneg %p45
        %s177 = sand.u32 %s63, 1
        %s178 = scalar_lea.sflag [#allocation3], %s177
        %s179 = sand.u32 %s63, 1
        %s180 = smul.addr %s179, 6
        %s181 = scalar_lea.vmem [#allocation6], %s180
        %p182 = pneg %p76
        %p183 = pneg %p73
        %p184 = pneg %p104
        %p185 = pneg %p101
        %s186 = sand.u32 %s91, 1
        %s187 = scalar_lea.sflag [#allocation4], %s186
        %s188 = sand.u32 %s91, 1
        %s189 = smul.addr %s188, 6
        %s190 = scalar_lea.vmem [#allocation7], %s189
        %s191 = smul.u32 %s24, 128
        %s192 = sld [smem:[#allocation2 + %s191]]
        %s193 = sadd.s32 %s191, 1
        %s194 = sld [smem:[#allocation2 + %s193]]
        %s195 = sadd.s32 %s191, 2
        %s196 = sld [smem:[#allocation2 + %s195]]
        %s197 = sadd.s32 %s191, 3
        %s198 = sld [smem:[#allocation2 + %s197]]
        %s199 = sadd.s32 %s191, 4
        %s200 = sld [smem:[#allocation2 + %s199]]
        %v201 = vld [vmem:[%s169] sm:$0x3]
        %v202 = vstv %s192
        %v203 = vmul.f32 %v201, %v202
        %v204 = vstv %s194
        %v205 = vadd.f32 %v203, %v204
        %v206 = vmax.f32 %v205, 0.0
        %v207 = vmin.f32 %v206, 1.0
        %s208 = scalar_lea.vmem %s169, 2 [#allocation6]
        %v209 = vld [vmem:[%s208] sm:$0x3]
        %v210 = vmul.f32 %v209, %v202
        %v211 = vadd.f32 %v210, %v204
        %v212 = vmax.f32 %v211, 0.0
        %v213 = vmin.f32 %v212, 1.0
        %s214 = scalar_lea.vmem %s169, 4 [#allocation6]
        %v215 = vld [vmem:[%s214] sm:$0x3]
        %v216 = vmul.f32 %v215, %v202
        %v217 = vadd.f32 %v216, %v204
        %v218 = vmax.f32 %v217, 0.0
        %v219 = vmin.f32 %v218, 1.0
        %v220 = vmax.f32 %v207, %v213
        %v221 = vmax.f32 %v220, %v219
        %v222 = vmin.f32 %v207, %v213
        %v223 = vmin.f32 %v222, %v219
        %v224 = vsub.f32 %v221, %v223
        %v225 = vmax.f32 %v221, 1e-08
        %v226 = vrcp.pop %v225
        %v227 = vmul.f32 %v224, %v226
        %vm228 = vcmp.eq.f32.partialorder %v224, 0.0
        %v229 = vsel %vm228, 1.0, %v224
        %v230 = vrcp.pop %v229
        %v231 = vmul.f32 1.0, %v230
        %v232 = vsub.f32 %v221, %v207
        %v233 = vmul.f32 %v232, %v231
        %v234 = vsub.f32 %v221, %v213
        %v235 = vmul.f32 %v234, %v231
        %v236 = vsub.f32 %v221, %v219
        %v237 = vmul.f32 %v236, %v231
        %vm238 = vcmp.eq.f32.partialorder %v221, %v207
        %v239 = vsub.f32 %v237, %v235
        %vm240 = vcmp.eq.f32.partialorder %v221, %v213
        %v241 = vadd.f32 %v233, 2.0
        %v242 = vsub.f32 %v241, %v237
        %v243 = vadd.f32 %v235, 4.0
        %v244 = vsub.f32 %v243, %v233
        %v245 = vsel %vm240, %v242, %v244
        %v246 = vsel %vm238, %v239, %v245
        %v247 = vmul.f32 %v246, 0.16666667
        %vm248 = vcmp.lt.f32.partialorder %v247, 0.0
        %v249 = vsel %vm248, 1.0, 0.0
        %v250 = vadd.f32 %v247, %v249
        %v251 = vsel %vm228, 0.0, %v250
        %v252 = vstv %s196
        %v253 = vmul.f32 %v227, %v252
        %v254 = vmax.f32 %v253, 0.0
        %v255 = vmin.f32 %v254, 1.0
        %v256 = vstv %s200
        %v257 = vadd.f32 %v251, %v256
        %vm258 = vcmp.lt.f32.partialorder %v257, 0.0
        %v259 = vceil.f32 %v257
        %v260 = vfloor.f32 %v257
        %v261 = vsel %vm258, %v259, %v260
        %v262 = vsub.f32 %v257, %v261
        %v263 = vmul.f32 %v262, 6.0
        %v264 = vfloor.f32 %v263
        %v265 = vsub.f32 %v263, %v264
        %v266 = vsub.f32 1.0, %v255
        %v267 = vmul.f32 %v221, %v266
        %v268 = vmul.f32 %v265, %v255
        %v269 = vsub.f32 1.0, %v268
        %v270 = vmul.f32 %v221, %v269
        %v271 = vsub.f32 1.0, %v265
        %v272 = vmul.f32 %v271, %v255
        %v273 = vsub.f32 1.0, %v272
        %v274 = vmul.f32 %v221, %v273
        %vm275 = vcmp.lt.f32.partialorder %v264, 0.0
        %v276 = vsel %vm275, 6.0, 0.0
        %v277 = vadd.f32 %v264, %v276
        %vm278 = vcmp.eq.f32.partialorder %v277, 0.0
        %vm279 = vcmp.eq.f32.partialorder %v277, 1.0
        %vm280 = vcmp.eq.f32.partialorder %v277, 2.0
        %vm281 = vcmp.eq.f32.partialorder %v277, 3.0
        %vm282 = vcmp.eq.f32.partialorder %v277, 4.0
        %vm283 = vmor %vm280, %vm281
        %v284 = vsel %vm282, %v274, %v221
        %v285 = vsel %vm283, %v267, %v284
        %v286 = vsel %vm279, %v270, %v285
        %v287 = vsel %vm278, %v221, %v286
        %v288 = vmax.f32 %v287, 1e-08
        %v289 = vlog2.pop %v288
        %v290 = vmul.f32 %v289, 0.6931472
        %v291 = vstv %s198
        %v292 = vmul.f32 %v291, %v290
        %v293 = vmul.f32 %v292, 1.442695
        %v294 = vpow.pop %v293
        %vm295 = vcmp.gt.f32.partialorder %v287, 0.0
        %v296 = vsel %vm295, %v294, 0.0
        %v297 = vmax.f32 %v296, 0.0
        %v298 = vmin.f32 %v297, 1.0
        %299 = vst [vmem:[%s190] sm:$0x3] %v298
        %vm300 = vmor %vm279, %vm280
        %v301 = vsel %vm281, %v270, %v267
        %v302 = vsel %vm300, %v221, %v301
        %v303 = vsel %vm278, %v274, %v302
        %v304 = vmax.f32 %v303, 1e-08
        %v305 = vlog2.pop %v304
        %v306 = vmul.f32 %v305, 0.6931472
        %v307 = vmul.f32 %v291, %v306
        %v308 = vmul.f32 %v307, 1.442695
        %v309 = vpow.pop %v308
        %vm310 = vcmp.gt.f32.partialorder %v303, 0.0
        %v311 = vsel %vm310, %v309, 0.0
        %v312 = vmax.f32 %v311, 0.0
        %v313 = vmin.f32 %v312, 1.0
        %s314 = scalar_lea.vmem %s190, 2 [#allocation7]
        %315 = vst [vmem:[%s314] sm:$0x3] %v313
        %vm316 = vmor %vm278, %vm279
        %vm317 = vmor %vm281, %vm282
        %v318 = vsel %vm317, %v221, %v270
        %v319 = vsel %vm280, %v274, %v318
        %v320 = vsel %vm316, %v267, %v319
        %v321 = vmax.f32 %v320, 1e-08
        %v322 = vlog2.pop %v321
        %v323 = vmul.f32 %v322, 0.6931472
        %v324 = vmul.f32 %v291, %v323
        %v325 = vmul.f32 %v324, 1.442695
        %v326 = vpow.pop %v325
        %vm327 = vcmp.gt.f32.partialorder %v320, 0.0
        %v328 = vsel %vm327, %v326, 0.0
        %v329 = vmax.f32 %v328, 0.0
        %v330 = vmin.f32 %v329, 1.0
        %s331 = scalar_lea.vmem %s190, 4 [#allocation7]
        %332 = vst [vmem:[%s331] sm:$0x3] %v330
        %s333 = sand.u32 %s91, 1
        %s334 = scalar_lea.sflag [#allocation4], %s333
        %s335 = sand.u32 %s91, 1
        %s336 = smul.addr %s335, 6
        %s337 = scalar_lea.vmem [#allocation7], %s336
        // Predicated region
        $region37: #{tpu_custom_call.1} parent=27 // pred_check
          %p338 = pneg %p101
        $region38: #{tpu_custom_call.1} parent=27 // pred_check_branch
          %340 = sbr.rel (%p338) target = $region40
        $region39: #{tpu_custom_call.1} parent=27 // pred_region
          %s342 = ssub.s32 96, 96
          %343 = vsyncadd %s334, %s342
          %s344 = smul.addr %s24, 3
          %s345 = sadd.s32 %s25, %s344
          %s346 = smul.addr %s345, 32
          %s347 = scalar_lea.hbm %s2, %s346
          %s348 = sshll.u32 %s337, 4
          %s349 = int_to_ptr.vmem [resolvable:$true] %s348
          %354 = dma.vmem_to_hbm [thread:$0]  %s349, 96, %s347, %s334, 32, 32, 2
        $region40: #{tpu_custom_call.1} parent=27 // pred_fallthru
          _
      $region28: #{tpu_custom_call.1} parent=5 // pred_fallthru
        _
      %p355 = scmp.le.s32.totalorder 2, %s15
      // Predicated region
      $region41: #{tpu_custom_call.1} parent=5 // pred_check
        %p356 = pneg %p355
      $region42: #{tpu_custom_call.1} parent=5 // pred_check_branch
        %358 = sbr.rel (%p356) target = $region44
      $region43: #{tpu_custom_call.1} parent=5 // pred_region
        %s359 = ssub.s32 %s15, 2
        // Predicated region
        $region45: #{tpu_custom_call.1} parent=43 // pred_check
          %p360 = pneg %p107
        $region46: #{tpu_custom_call.1} parent=43 // pred_check_branch
          %362 = sbr.rel (%p360) target = $region48
        $region47: #{tpu_custom_call.1} parent=43 // pred_region
          %s363 = sand.u32 %s92, 1
          %s364 = scalar_lea.sflag [#allocation4], %s363
          %s365 = sand.u32 %s92, 1
          %s366 = smul.addr %s365, 6
          %s367 = scalar_lea.vmem [#allocation7], %s366
          %368 = dma.done %s364, 96
        $region48: #{tpu_custom_call.1} parent=43 // pred_fallthru
          _
      $region44: #{tpu_custom_call.1} parent=5 // pred_fallthru
        _
    $region6: #{tpu_custom_call.1} parent=1 // loop_footer
      %s19 = sadd.s32 1, %s15
    $region7: #{tpu_custom_call.1} parent=1 // loop_footer_branch
      %14 = sbr.rel target = $region3
    $region8: #{tpu_custom_call.1} parent=1 // loop_exit
      _
    %369 = vsyncpa [#allocation3], 1
    %s370 = scalar_lea.sflag [#allocation3], 1
    %371 = vsyncpa %s370, 1
    %372 = vsyncpa [#allocation4], 1
    %s373 = scalar_lea.sflag [#allocation4], 1
    %374 = vsyncpa %s373, 1
    %375 = vsyncpa [#allocation5], 1
    %s376 = scalar_lea.sflag [#allocation5], 1
    %377 = vsyncpa %s376, 1

</llo_original>
